<compile_context>
chip_gen: v5e
topology: v5e:2x2
jax: 0.10.0
libtpu: 0.0.40
codegen_flags: <defaults>
</compile_context>

<pallas_src>
import functools

import jax
import jax.numpy as jnp
from jax.experimental import pallas as pl
from jax.experimental.pallas import tpu as pltpu


def _gap_kernel(x_ref, o_ref, *, inv_hw):
    # x_ref: (tr, HW) block; o_ref: (tr, 1) block.
    x = x_ref[...].astype(jnp.float32)                 # f32 accumulation (safe for bf16 in)
    s = jnp.sum(x, axis=-1, keepdims=True)             # XLU cross-lane reduce over H*W
    o_ref[...] = (s * inv_hw).astype(o_ref.dtype)


def global_avg_pool2d(x, *, target_block_bytes=4 * 1024 * 1024):
    """x: (N, C, H, W) -> (N, C), mean over H*W (same as the PyTorch module)."""
    N, C, H, W = x.shape
    HW = H * W
    NC = N * C
    itemsize = jnp.dtype(x.dtype).itemsize

    # Flatten batch*channel into rows and spatial into lanes (free reshape for NCHW layout).
    xf = x.reshape(NC, HW)

    # Sublane packing: 8 rows/vreg for 32-bit, 16 for bf16, 32 for int8.
    sublane = 8 * max(1, 4 // itemsize)

    # Row tile: ~target_block_bytes per input block, rounded to sublane packing,
    # clamped to [sublane, NC].  If NC itself is small, take all rows (full dim is legal).
    tr = max(1, target_block_bytes // max(1, HW * itemsize))
    tr = max(sublane, (tr // sublane) * sublane)
    tr = min(NC, tr)

    grid = (pl.cdiv(NC, tr),)
    kernel = functools.partial(_gap_kernel, inv_hw=float(1.0 / HW))

    out = pl.pallas_call(
        kernel,
        out_shape=jax.ShapeDtypeStruct((NC, 1), x.dtype),
        grid_spec=pltpu.PrefetchScalarGridSpec(
            num_scalar_prefetch=0,
            grid=grid,
            in_specs=[pl.BlockSpec((tr, HW), lambda i: (i, 0))],
            out_specs=pl.BlockSpec((tr, 1), lambda i: (i, 0)),
        ),
        compiler_params=pltpu.CompilerParams(
            # Row tiles are independent -> megacore / 2-TC sharding on v7x.
            dimension_semantics=("parallel",),
            # Plenty for 2x-buffered ~4 MiB input blocks; safe on v7x's 64 MiB physical VMEM.
            vmem_limit_bytes=32 * 1024 * 1024,
        ),
    )(xf)

    return out.reshape(N, C)


if __name__ == "__main__":
    key = jax.random.PRNGKey(0)
    x = jax.random.normal(key, (2, 4, 16, 16), dtype=jnp.float32)

    out = global_avg_pool2d(x)
    out = jax.block_until_ready(out)

    # reference: torch.mean(x.view(N, C, -1), dim=2)
    ref = jnp.mean(x.reshape(x.shape[0], x.shape[1], -1), axis=2)
    assert out.shape == (2, 4), out.shape
    assert jnp.allclose(out, ref, atol=1e-5, rtol=1e-5)

    print("KERNEL_OK")
</pallas_src>

<mosaic_0001>
module attributes {stable_mosaic.version = 11 : i64} {
  func.func @_gap_kernel(%arg0: i32, %arg1: memref<8x256xf32, #tpu.memory_space<vmem>>, %arg2: memref<8x1xf32, #tpu.memory_space<vmem>>) attributes {dimension_semantics = [#tpu.dimension_semantics<parallel>], iteration_bounds = array<i64: 1>, scalar_prefetch = 0 : i64, scratch_operands = 0 : i64, tpu.core_type = #tpu.core_type<tc>, window_params = [{transform_indices = @transform_0, window_bounds = array<i64: 8, 256>}, {transform_indices = @transform_1, window_bounds = array<i64: 8, 1>}]} {
    %c0 = arith.constant 0 : index
    %c0_0 = arith.constant 0 : index
    %0 = vector.load %arg1[%c0, %c0_0] : memref<8x256xf32, #tpu.memory_space<vmem>>, vector<8x256xf32>
    %cst = arith.constant dense<0.000000e+00> : vector<8xf32>
    %1 = vector.multi_reduction <add>, %0, %cst [1] : vector<8x256xf32> to vector<8xf32>
    %2 = vector.shape_cast %1 : vector<8xf32> to vector<8x1xf32>
    %cst_1 = arith.constant 3.906250e-03 : f32
    %3 = vector.broadcast %cst_1 : f32 to vector<8x1xf32>
    %4 = arith.mulf %2, %3 : vector<8x1xf32>
    %c0_2 = arith.constant 0 : index
    %c0_3 = arith.constant 0 : index
    %5 = vector.load %arg2[%c0_2, %c0_3] : memref<8x1xf32, #tpu.memory_space<vmem>>, vector<8x1xf32>
    tpu.vector_store %arg2[%c0_2, %c0_3], %4 {strides = array<i32>} : memref<8x1xf32, #tpu.memory_space<vmem>>, vector<8x1xf32>,
    return
  }
  func.func @transform_0(%arg0: i32) -> (i32, i32) {
    %c0_i32 = arith.constant 0 : i32
    %c0_i32_0 = arith.constant 0 : i32
    return %arg0, %c0_i32 : i32, i32
  }
  func.func @transform_1(%arg0: i32) -> (i32, i32) {
    %c0_i32 = arith.constant 0 : i32
    %c0_i32_0 = arith.constant 0 : i32
    return %arg0, %c0_i32 : i32, i32
  }
}

</mosaic_0001>

<llo_original>
// kernel: tpu_custom_call.1
$region0: #{tpu_custom_call.1}
  #allocation0 [shape = 'u32[]', space=smem, size = 0x4, offset = 0x4, fixed_abs, tag = 'smem constant byte address 0x4 - core index']
  #allocation1 [shape = 'u32[72,128]{1,0:T(1,128)}', space=vmem, size = 0x9000, scoped, tag = 'internal scratch']
  %s0 = inlined_call_operand.hbm [shape: f32[8,256], index: 0, kind: input, shape index: {}]
  %s1 = inlined_call_operand.vmem [shape: f32[8,1], index: 1, kind: output, shape index: {}]
  %s2 = sld [smem:[#allocation0]]
  $region18: #{tpu_custom_call.1} parent=0
    _
  %s4 = ssub.s32 1, %s2
  %s5 = scalar_select 0, %s4, %s2
  $region1: #{tpu_custom_call.1} parent=0
    #allocation2 [shape = 'u8[8192]{0}', space=vmem, size = 0x2000, scoped, tag = 'input window, operand 0, single buffered']
    #allocation3 [shape = 's32[1]{0}', space=sflag, size = 0x4, scoped, tag = 'scoped memory for tpu_custom_call.1']
    %6 = vsyncpa [#allocation3], 0
    // Predicated region
    $region2: #{tpu_custom_call.1} parent=1 // pred_check
      _
    $region3: #{tpu_custom_call.1} parent=1 // pred_check_branch
      %8 = sbr.rel (0) target = $region5
    $region4: #{tpu_custom_call.1} parent=1 // pred_region
      %10 = vsyncadd [#allocation3], 0
      %s12 = sshll.u32 %s0, 4
      %s13 = int_to_ptr.hbm [resolvable:$true] %s12
      %s14 = sshll.u32 [#allocation2], 4
      %s15 = int_to_ptr.vmem [resolvable:$true] %s14
      %17 = dma.hbm_to_vmem [thread:$0]  %s13, 256, %s15, [#allocation3]
    $region5: #{tpu_custom_call.1} parent=1 // pred_fallthru
      _
    // Predicated region
    $region6: #{tpu_custom_call.1} parent=1 // pred_check
      _
    $region7: #{tpu_custom_call.1} parent=1 // pred_check_branch
      %19 = sbr.rel (0) target = $region9
    $region8: #{tpu_custom_call.1} parent=1 // pred_region
      %21 = dma.done [#allocation3], 256
    $region9: #{tpu_custom_call.1} parent=1 // pred_fallthru
      _
    %v22 = vld [vmem:[#allocation2] sm:$0xff]
    %v23 = vld [vmem:[#allocation2 + $0x8] sm:$0xff]
    %v24 = vadd.f32 %v22, %v23
    %25 = vadd.xlane.f32.xlu0 %v24
    %v26 = vpop.xlane.xlu0 %25
    %v27 = vmul.f32 %v26, 0.00390625
    %vm28 = vcmask 7168
    %29 = vst.msk [vmem:[%s1] sm:$0xff] %vm28, %v27
    // Predicated region
    $region10: #{tpu_custom_call.1} parent=1 // pred_check
      _
    $region11: #{tpu_custom_call.1} parent=1 // pred_check_branch
      %31 = sbr.rel (0) target = $region13
    $region12: #{tpu_custom_call.1} parent=1 // pred_region
      _
    $region13: #{tpu_custom_call.1} parent=1 // pred_fallthru
      _
    // Predicated region
    $region14: #{tpu_custom_call.1} parent=1 // pred_check
      _
    $region15: #{tpu_custom_call.1} parent=1 // pred_check_branch
      %33 = sbr.rel (0) target = $region17
    $region16: #{tpu_custom_call.1} parent=1 // pred_region
      _
    $region17: #{tpu_custom_call.1} parent=1 // pred_fallthru
      _
    %34 = vsyncpa [#allocation3], 1

</llo_original>
